<compile_context>
chip_gen: v6e
topology: v6e:2x2x1
jax: 0.10.0
libtpu: 0.0.40
codegen_flags: <defaults>
</compile_context>

<pallas_src>
import functools
import math

import jax
import jax.numpy as jnp
from jax import lax
from jax.experimental import pallas as pl
from jax.experimental.pallas import tpu as pltpu

VMEM_SPEC = pl.BlockSpec(memory_space=pltpu.MemorySpace.VMEM)
LN_EPS = 1e-5


def _pick_tile(dim, pref, align):
    """Largest `align`-multiple divisor of dim that is <= pref; full extent for small dims."""
    if dim <= pref:
        return dim
    t = (pref // align) * align
    while t >= align:
        if dim % t == 0:
            return t
        t -= align
    # TODO(synk): pad + masked epilogue for awkward extents instead of one oversized block.
    return dim


def _bf16_dot(x, w):
    """MXU matmul: x cast to bf16, w already bf16 (in, out) layout, f32 accumulation."""
    return jnp.dot(x.astype(jnp.bfloat16), w, preferred_element_type=jnp.float32)


# --------------------- fused FFN (dense1 + relu + dense2 [+ LayerNorm]) --------------------- #

def _make_ffn_kernel(fuse_ln):
    def kernel(*refs):
        if fuse_ln:
            x_ref, w1_ref, b1_ref, w2_ref, b2_ref, g_ref, bln_ref, o_ref = refs
        else:
            x_ref, w1_ref, b1_ref, w2_ref, b2_ref, o_ref = refs
        h = jnp.maximum(_bf16_dot(x_ref[...], w1_ref[...]) + b1_ref[...], 0.0)
        # TODO(synk): nn.Dropout(0.3) applied as identity (eval-mode semantics).
        y = _bf16_dot(h, w2_ref[...]) + b2_ref[...]
        if fuse_ln:
            mu = jnp.mean(y, axis=-1, keepdims=True)
            var = jnp.mean((y - mu) ** 2, axis=-1, keepdims=True)
            y = (y - mu) * lax.rsqrt(var + LN_EPS) * g_ref[...] + bln_ref[...]
        o_ref[...] = y
    return kernel


def ffn_forward(x, p, ln=None):
    """dense2(relu(dense1(x))) [+ LayerNorm].  One pallas_call, grid over M rows."""
    m, h = x.shape
    tm = _pick_tile(m, 256, 8)
    row = pl.BlockSpec((tm, h), lambda i: (i, 0))
    wfull = pl.BlockSpec((h, h), lambda i: (0, 0))
    bfull = pl.BlockSpec((1, h), lambda i: (0, 0))
    in_specs = [row, wfull, bfull, wfull, bfull]
    args = [x, p["w1"], p["b1"], p["w2"], p["b2"]]
    if ln is not None:
        in_specs += [bfull, bfull]
        args += [ln["g"], ln["b"]]
    # TODO(synk): for very large H the full (H, H) weight blocks should be K/N-tiled
    # (v7x 32 MiB scoped VMEM default); fine at these hidden sizes.
    return pl.pallas_call(
        _make_ffn_kernel(ln is not None),
        out_shape=jax.ShapeDtypeStruct((m, h), jnp.float32),
        grid_spec=pltpu.PrefetchScalarGridSpec(
            num_scalar_prefetch=0, grid=(m // tm,),
            in_specs=in_specs, out_specs=row),
        compiler_params=pltpu.CompilerParams(dimension_semantics=("parallel",)),
    )(*args)


# ------------------ fused CodeAdapter: out_proj(v_proj(x)) -> FFN -> +x -> LN ---------------- #
# nn.MultiheadAttention over a length-1 sequence: the single softmax weight is 1.0, so the
# attention output is exactly out_proj(v_proj(x)) -- no score matmul / softmax needed.

def _code_adapter_kernel(x_ref, wv_ref, bv_ref, wo_ref, bo_ref,
                         w1_ref, b1_ref, w2_ref, b2_ref, g_ref, bln_ref, o_ref):
    x = x_ref[...]
    v = _bf16_dot(x, wv_ref[...]) + bv_ref[...]          # MHA v_proj
    y = _bf16_dot(v, wo_ref[...]) + bo_ref[...]          # MHA out_proj
    hfc = jnp.maximum(_bf16_dot(y, w1_ref[...]) + b1_ref[...], 0.0)
    # TODO(synk): nn.Dropout(0.3) applied as identity (eval-mode semantics).
    z = _bf16_dot(hfc, w2_ref[...]) + b2_ref[...]
    y2 = x + z                                            # residual
    mu = jnp.mean(y2, axis=-1, keepdims=True)
    var = jnp.mean((y2 - mu) ** 2, axis=-1, keepdims=True)
    o_ref[...] = (y2 - mu) * lax.rsqrt(var + LN_EPS) * g_ref[...] + bln_ref[...]


def code_adapter_forward(x, p):
    m, h = x.shape
    tm = _pick_tile(m, 256, 8)
    row = pl.BlockSpec((tm, h), lambda i: (i, 0))
    wfull = pl.BlockSpec((h, h), lambda i: (0, 0))
    bfull = pl.BlockSpec((1, h), lambda i: (0, 0))
    return pl.pallas_call(
        _code_adapter_kernel,
        out_shape=jax.ShapeDtypeStruct((m, h), jnp.float32),
        grid_spec=pltpu.PrefetchScalarGridSpec(
            num_scalar_prefetch=0, grid=(m // tm,),
            in_specs=[row, wfull, bfull, wfull, bfull,
                      wfull, bfull, wfull, bfull, bfull, bfull],
            out_specs=row),
        compiler_params=pltpu.CompilerParams(dimension_semantics=("parallel",)),
    )(x, p["wv"], p["bv"], p["wo"], p["bo"],
      p["w1"], p["b1"], p["w2"], p["b2"], p["ln_g"], p["ln_b"])


# -------------------------- fused CrossAttention (Lq = 1 per batch) -------------------------- #
# query_layer/key_layer/value_layer are composed with the MHA in_proj at init (exact affine
# composition), and 1/sqrt(dh) is folded into the composed Q weights.  Per-head score / softmax /
# context are done with 2-D matmuls against a 0/1 head-selector matrix, so no 3-D reshapes or
# wrapper transposes are ever materialized.

def _cross_attn_kernel(q_ref, kv_ref, wq_ref, bq_ref, wk_ref, bk_ref, wv_ref, bv_ref,
                       wo_ref, bo_ref, hsel_ref, hselt_ref, o_ref):
    q = _bf16_dot(q_ref[0], wq_ref[...]) + bq_ref[...]          # (1, H), scale folded into wq/bq
    kv = kv_ref[0]                                              # (S, H) f32
    k = _bf16_dot(kv, wk_ref[...]) + bk_ref[...]                # (S, H)
    v = _bf16_dot(kv, wv_ref[...]) + bv_ref[...]                # (S, H)
    # scores[s, h] = sum_d q[h*dh+d] * k[s, h*dh+d]   via (S,H) @ (H, heads) selector matmul
    scores = jnp.dot(k * q, hsel_ref[...], preferred_element_type=jnp.float32)   # (S, heads)
    m = jnp.max(scores, axis=0, keepdims=True)
    p = jnp.exp(scores - m)
    p = p * pl.reciprocal(jnp.sum(p, axis=0, keepdims=True), approx=True)        # softmax over S
    # expand per-head probs back across that head's dh lanes, weight v, reduce over S
    p_full = jnp.dot(p, hselt_ref[...], preferred_element_type=jnp.float32)      # (S, H)
    ctx = jnp.sum(p_full * v, axis=0, keepdims=True)                             # (1, H)
    o_ref[0] = _bf16_dot(ctx, wo_ref[...]) + bo_ref[...]


def cross_attention_forward(p, query, hidden):
    """query: (B, H) description query, hidden: (B, S, H) code hidden states -> (B, H)."""
    b, s, h = hidden.shape
    nh = p["hsel"].shape[1]
    q3 = query.reshape(b, 1, h)
    wfull = pl.BlockSpec((h, h), lambda i: (0, 0))
    bfull = pl.BlockSpec((1, h), lambda i: (0, 0))
    out = pl.pallas_call(
        _cross_attn_kernel,
        out_shape=jax.ShapeDtypeStruct((b, 1, h), jnp.float32),
        grid_spec=pltpu.PrefetchScalarGridSpec(
            num_scalar_prefetch=0, grid=(b,),
            in_specs=[
                pl.BlockSpec((1, 1, h), lambda i: (i, 0, 0)),     # query row
                pl.BlockSpec((1, s, h), lambda i: (i, 0, 0)),     # hidden states for this batch
                wfull, bfull, wfull, bfull, wfull, bfull, wfull, bfull,
                pl.BlockSpec((h, nh), lambda i: (0, 0)),
                pl.BlockSpec((nh, h), lambda i: (0, 0)),
            ],
            out_specs=pl.BlockSpec((1, 1, h), lambda i: (i, 0, 0))),
        compiler_params=pltpu.CompilerParams(dimension_semantics=("parallel",)),
    )(q3, hidden, p["wq"], p["bq"], p["wk"], p["bk"], p["wv"], p["bv"],
      p["wo"], p["bo"], p["hsel"], p["hsel_t"])
    return out.reshape(b, h)


# ---------------------------------------- loss kernels --------------------------------------- #

def _mse_kernel(a_ref, b_ref, o_ref):
    d = a_ref[...] - b_ref[...]
    o_ref[...] = jnp.mean(d * d, keepdims=True)


def mse_loss(a, b):
    return pl.pallas_call(
        _mse_kernel,
        out_shape=jax.ShapeDtypeStruct((1, 1), jnp.float32),
        in_specs=[VMEM_SPEC] * 2, out_specs=VMEM_SPEC,
    )(a, b)[0, 0]


def _info_nce_kernel(q_ref, k_ref, o_ref, *, temperature):
    q = q_ref[...]
    k = k_ref[...]
    # F.normalize(dim=1, eps=1e-12): x / max(||x||, eps) == x * rsqrt(max(||x||^2, eps^2))
    qn = q * lax.rsqrt(jnp.maximum(jnp.sum(q * q, axis=-1, keepdims=True), 1e-24))
    kn = k * lax.rsqrt(jnp.maximum(jnp.sum(k * k, axis=-1, keepdims=True), 1e-24))
    inv_t = 1.0 / temperature
    logits = lax.dot_general(qn, kn, dimension_numbers=(((1,), (1,)), ((), ())),
                             preferred_element_type=jnp.float32) * inv_t          # (B, B)
    m = jnp.max(logits, axis=-1, keepdims=True)
    lse = m + jnp.log(jnp.sum(jnp.exp(logits - m), axis=-1, keepdims=True))       # (B, 1)
    diag = jnp.sum(qn * kn, axis=-1, keepdims=True) * inv_t                       # (B, 1)
    o_ref[...] = jnp.mean(lse - diag, keepdims=True)   # cross_entropy with labels=arange(B)


def info_nce_loss(query, key, temperature=0.1):
    return pl.pallas_call(
        functools.partial(_info_nce_kernel, temperature=temperature),
        out_shape=jax.ShapeDtypeStruct((1, 1), jnp.float32),
        in_specs=[VMEM_SPEC] * 2, out_specs=VMEM_SPEC,
    )(query, key)[0, 0]


# ----------------------------------------- model glue ---------------------------------------- #

def roberta_stub(input_ids, attention_mask, emb):
    # TODO(synk): RobertaModel.from_pretrained cannot be loaded in-script; replaced by a
    # deterministic synthetic embedding encoder producing last_hidden_state (B, S, H).
    h = jnp.tanh(emb[input_ids])
    return h * attention_mask[..., None].astype(jnp.float32)


def desc_encoder_forward(params, input_ids, attention_mask):
    hidden = roberta_stub(input_ids, attention_mask, params["desc_emb"])
    cls = hidden[:, 0, :]
    # DescriptionAdapter: LayerNorm(FFN(cls)) fused into one kernel
    return ffn_forward(cls, params["desc_adapter_ffn"], ln=params["desc_adapter_ln"])


def code_encoder_forward(params, code_ids, code_mask, des_query, flag):
    hidden = roberta_stub(code_ids, code_mask, params["code_emb"])     # (B, S, H)
    cls = hidden[:, 0, :]
    cls = code_adapter_forward(cls, params["code_adapter"])
    if flag == "train":
        refined = cross_attention_forward(params["cross_attention"], des_query, hidden)
        logits = ffn_forward(cls, params["desc_classifier_ffn"])
        description_loss = mse_loss(logits, refined)
        vuln = 0.2 * cls + 0.8 * refined
        return vuln, description_loss
    refined = ffn_forward(cls, params["desc_classifier_ffn"])
    vuln = 0.2 * cls + 0.8 * refined
    return vuln, None


def contrastive_forward(params, func_ids, func_mask,
                        desc_ids=None, desc_mask=None,
                        src_ids=None, src_mask=None,
                        sink_ids=None, sink_mask=None,
                        flag=None):
    if flag == "train":
        b = desc_ids.shape[0]
        # Batch the three description encoders (reason/source/sink) into ONE call:
        # 3x fewer kernel launches and 3x larger M into the matmuls.
        ids3 = jnp.concatenate([desc_ids, src_ids, sink_ids], axis=0)
        mask3 = jnp.concatenate([desc_mask, src_mask, sink_mask], axis=0)
        cls3 = desc_encoder_forward(params, ids3, mask3)
        reason, source, sink = cls3[:b], cls3[b:2 * b], cls3[2 * b:]
        desc_rep = 0.25 * source + 0.25 * sink + 0.5 * reason
    elif flag == "test":
        desc_rep = desc_encoder_forward(params, desc_ids, desc_mask)
    else:
        desc_rep = None
    vuln, desc_loss = code_encoder_forward(params, func_ids, func_mask, desc_rep, flag)
    if flag == "train":
        info = info_nce_loss(vuln, desc_rep, temperature=0.1)
        return info + 0.7 * desc_loss
    elif flag == "vul":
        return vuln
    return vuln, desc_rep


# --------------------------------------- parameter init -------------------------------------- #

def _dense_raw(key, n_out, n_in):
    kw, kb = jax.random.split(key)
    return (0.05 * jax.random.normal(kw, (n_out, n_in), jnp.float32),   # torch (out, in)
            0.02 * jax.random.normal(kb, (n_out,), jnp.float32))


def _kn(w):
    """torch (out, in) weight -> (in, out) bf16 so kernels do a plain x @ W."""
    return jnp.asarray(w.T, jnp.bfloat16)


def _brow(b):
    return b.reshape(1, -1).astype(jnp.float32)


def _ffn_params(key, h):
    k1, k2 = jax.random.split(key)
    w1, b1 = _dense_raw(k1, h, h)
    w2, b2 = _dense_raw(k2, h, h)
    return {"w1": _kn(w1), "b1": _brow(b1), "w2": _kn(w2), "b2": _brow(b2)}


def init_params(key, hidden, vocab, num_heads=8):
    keys = jax.random.split(key, 12)
    h = hidden
    dh = h // num_heads
    scale = 1.0 / math.sqrt(dh)
    ones = jnp.ones((1, h), jnp.float32)
    zeros = jnp.zeros((1, h), jnp.float32)

    # CodeAdapter MHA (length-1 sequence): only v_proj and out_proj contribute.
    ca_in_w, ca_in_b = _dense_raw(keys[2], 3 * h, h)
    ca_out_w, ca_out_b = _dense_raw(keys[3], h, h)
    ca_ffn = _ffn_params(keys[4], h)
    code_adapter = {
        "wv": _kn(ca_in_w[2 * h:]), "bv": _brow(ca_in_b[2 * h:]),
        "wo": _kn(ca_out_w), "bo": _brow(ca_out_b),
        "w1": ca_ffn["w1"], "b1": ca_ffn["b1"], "w2": ca_ffn["w2"], "b2": ca_ffn["b2"],
        "ln_g": ones, "ln_b": zeros,
    }

    # CrossAttention: compose {query,key,value}_layer with the MHA in_proj (exact), fold 1/sqrt(dh) into q.
    ql_w, ql_b = _dense_raw(keys[5], h, h)
    kl_w, kl_b = _dense_raw(keys[6], h, h)
    vl_w, vl_b = _dense_raw(keys[7], h, h)
    mha_in_w, mha_in_b = _dense_raw(keys[8], 3 * h, h)
    mha_out_w, mha_out_b = _dense_raw(keys[9], h, h)
    qw, kw, vw = mha_in_w[:h], mha_in_w[h:2 * h], mha_in_w[2 * h:]
    qb, kb, vb = mha_in_b[:h], mha_in_b[h:2 * h], mha_in_b[2 * h:]

    def compose(wl, bl, win, bin_):
        # in_proj(layer(x)) == x @ (win @ wl)^T + (bl @ win^T + bin)
        return jnp.dot(win, wl), jnp.dot(bl, win.T) + bin_

    wq_c, bq_c = compose(ql_w, ql_b, qw, qb)
    wk_c, bk_c = compose(kl_w, kl_b, kw, kb)
    wv_c, bv_c = compose(vl_w, vl_b, vw, vb)

    lane = jnp.arange(h)[:, None] // dh
    head = jnp.arange(num_heads)[None, :]
    hsel = (lane == head).astype(jnp.float32)                     # (H, heads) 0/1 head selector
    cross = {
        "wq": _kn(wq_c * scale), "bq": _brow(bq_c * scale),
        "wk": _kn(wk_c), "bk": _brow(bk_c),
        "wv": _kn(wv_c), "bv": _brow(bv_c),
        "wo": _kn(mha_out_w), "bo": _brow(mha_out_b),
        "hsel": hsel, "hsel_t": hsel.T,
    }

    return {
        "code_emb": 0.1 * jax.random.normal(keys[0], (vocab, h), jnp.float32),
        "desc_emb": 0.1 * jax.random.normal(keys[1], (vocab, h), jnp.float32),
        "desc_adapter_ffn": _ffn_params(keys[10], h),
        "desc_adapter_ln": {"g": ones, "b": zeros},
        "code_adapter": code_adapter,
        "cross_attention": cross,
        "desc_classifier_ffn": _ffn_params(keys[11], h),
    }


# --------------------------------------------- main ------------------------------------------ #

if __name__ == "__main__":
    B, S, H, V, HEADS = 4, 8, 128, 50, 8        # hidden=128 -> 8 heads x head_dim 16 (lane-dense)
    key = jax.random.PRNGKey(0)
    kp, k0, k1, k2, k3 = jax.random.split(key, 5)
    params = init_params(kp, H, V, num_heads=HEADS)

    func_ids = jax.random.randint(k0, (B, S), 0, V)
    desc_ids = jax.random.randint(k1, (B, S), 0, V)
    src_ids = jax.random.randint(k2, (B, S), 0, V)
    sink_ids = jax.random.randint(k3, (B, S), 0, V)
    mask = jnp.ones((B, S), jnp.int32)

    loss = contrastive_forward(
        params,
        func_ids, mask,
        desc_ids, mask,
        src_ids, mask,
        sink_ids, mask,
        flag="train",
    )
    jax.block_until_ready(loss)
    print("KERNEL_OK")
</pallas_src>

<mosaic_0001>
module attributes {stable_mosaic.version = 11 : i64} {
  func.func @kernel(%arg0: i32, %arg1: memref<12x128xf32, #tpu.memory_space<vmem>>, %arg2: memref<128x128xbf16, #tpu.memory_space<vmem>>, %arg3: memref<1x128xf32, #tpu.memory_space<vmem>>, %arg4: memref<128x128xbf16, #tpu.memory_space<vmem>>, %arg5: memref<1x128xf32, #tpu.memory_space<vmem>>, %arg6: memref<1x128xf32, #tpu.memory_space<vmem>>, %arg7: memref<1x128xf32, #tpu.memory_space<vmem>>, %arg8: memref<12x128xf32, #tpu.memory_space<vmem>>) attributes {dimension_semantics = [#tpu.dimension_semantics<parallel>], iteration_bounds = array<i64: 1>, scalar_prefetch = 0 : i64, scratch_operands = 0 : i64, tpu.core_type = #tpu.core_type<tc>, window_params = [{transform_indices = @transform_0, window_bounds = array<i64: 12, 128>}, {pipeline_mode = #tpu.pipeline_mode<synchronous>, transform_indices = @transform_1, window_bounds = array<i64: 128, 128>}, {pipeline_mode = #tpu.pipeline_mode<synchronous>, transform_indices = @transform_2, window_bounds = array<i64: 1, 128>}, {pipeline_mode = #tpu.pipeline_mode<synchronous>, transform_indices = @transform_3, window_bounds = array<i64: 128, 128>}, {pipeline_mode = #tpu.pipeline_mode<synchronous>, transform_indices = @transform_4, window_bounds = array<i64: 1, 128>}, {pipeline_mode = #tpu.pipeline_mode<synchronous>, transform_indices = @transform_5, window_bounds = array<i64: 1, 128>}, {pipeline_mode = #tpu.pipeline_mode<synchronous>, transform_indices = @transform_6, window_bounds = array<i64: 1, 128>}, {transform_indices = @transform_7, window_bounds = array<i64: 12, 128>}]} {
    %c0 = arith.constant 0 : index
    %c0_0 = arith.constant 0 : index
    %0 = vector.load %arg1[%c0, %c0_0] : memref<12x128xf32, #tpu.memory_space<vmem>>, vector<12x128xf32>
    %c0_1 = arith.constant 0 : index
    %c0_2 = arith.constant 0 : index
    %1 = vector.load %arg2[%c0_1, %c0_2] : memref<128x128xbf16, #tpu.memory_space<vmem>>, vector<128x128xbf16>
    %2 = arith.truncf %0 : vector<12x128xf32> to vector<12x128xbf16>
    %cst = arith.constant dense<0.000000e+00> : vector<12x128xf32>
    %3 = tpu.matmul %2, %1, %cst {dimension_numbers = #tpu.dot_dimension_numbers<[1], [0], [0], [1], [0, 0, 1, 1], [], []>} : vector<12x128xbf16>, vector<128x128xbf16>, vector<12x128xf32> -> vector<12x128xf32>
    %c0_3 = arith.constant 0 : index
    %c0_4 = arith.constant 0 : index
    %4 = vector.load %arg3[%c0_3, %c0_4] : memref<1x128xf32, #tpu.memory_space<vmem>>, vector<1x128xf32>
    %5 = vector.broadcast %4 : vector<1x128xf32> to vector<12x128xf32>
    %6 = arith.addf %3, %5 : vector<12x128xf32>
    %cst_5 = arith.constant 0.000000e+00 : f32
    %7 = vector.broadcast %cst_5 : f32 to vector<12x128xf32>
    %8 = arith.maximumf %6, %7 : vector<12x128xf32>
    %c0_6 = arith.constant 0 : index
    %c0_7 = arith.constant 0 : index
    %9 = vector.load %arg4[%c0_6, %c0_7] : memref<128x128xbf16, #tpu.memory_space<vmem>>, vector<128x128xbf16>
    %10 = arith.truncf %8 : vector<12x128xf32> to vector<12x128xbf16>
    %cst_8 = arith.constant dense<0.000000e+00> : vector<12x128xf32>
    %11 = tpu.matmul %10, %9, %cst_8 {dimension_numbers = #tpu.dot_dimension_numbers<[1], [0], [0], [1], [0, 0, 1, 1], [], []>} : vector<12x128xbf16>, vector<128x128xbf16>, vector<12x128xf32> -> vector<12x128xf32>
    %c0_9 = arith.constant 0 : index
    %c0_10 = arith.constant 0 : index
    %12 = vector.load %arg5[%c0_9, %c0_10] : memref<1x128xf32, #tpu.memory_space<vmem>>, vector<1x128xf32>
    %13 = vector.broadcast %12 : vector<1x128xf32> to vector<12x128xf32>
    %14 = arith.addf %11, %13 : vector<12x128xf32>
    %cst_11 = arith.constant dense<0.000000e+00> : vector<12xf32>
    %15 = vector.multi_reduction <add>, %14, %cst_11 [1] : vector<12x128xf32> to vector<12xf32>
    %16 = vector.shape_cast %15 : vector<12xf32> to vector<12x1xf32>
    %cst_12 = arith.constant 1.280000e+02 : f32
    %17 = vector.broadcast %cst_12 : f32 to vector<12x1xf32>
    %18 = arith.divf %16, %17 : vector<12x1xf32>
    %19 = vector.broadcast %18 : vector<12x1xf32> to vector<12x128xf32>
    %20 = arith.subf %14, %19 : vector<12x128xf32>
    %21 = arith.mulf %20, %20 : vector<12x128xf32>
    %cst_13 = arith.constant dense<0.000000e+00> : vector<12xf32>
    %22 = vector.multi_reduction <add>, %21, %cst_13 [1] : vector<12x128xf32> to vector<12xf32>
    %23 = vector.shape_cast %22 : vector<12xf32> to vector<12x1xf32>
    %cst_14 = arith.constant 1.280000e+02 : f32
    %24 = vector.broadcast %cst_14 : f32 to vector<12x1xf32>
    %25 = arith.divf %23, %24 : vector<12x1xf32>
    %26 = vector.broadcast %18 : vector<12x1xf32> to vector<12x128xf32>
    %27 = arith.subf %14, %26 : vector<12x128xf32>
    %cst_15 = arith.constant 9.99999974E-6 : f32
    %28 = vector.broadcast %cst_15 : f32 to vector<12x1xf32>
    %29 = arith.addf %25, %28 : vector<12x1xf32>
    %30 = math.rsqrt %29 : vector<12x1xf32>
    %31 = vector.broadcast %30 : vector<12x1xf32> to vector<12x128xf32>
    %32 = arith.mulf %27, %31 : vector<12x128xf32>
    %c0_16 = arith.constant 0 : index
    %c0_17 = arith.constant 0 : index
    %33 = vector.load %arg6[%c0_16, %c0_17] : memref<1x128xf32, #tpu.memory_space<vmem>>, vector<1x128xf32>
    %34 = vector.broadcast %33 : vector<1x128xf32> to vector<12x128xf32>
    %35 = arith.mulf %32, %34 : vector<12x128xf32>
    %c0_18 = arith.constant 0 : index
    %c0_19 = arith.constant 0 : index
    %36 = vector.load %arg7[%c0_18, %c0_19] : memref<1x128xf32, #tpu.memory_space<vmem>>, vector<1x128xf32>
    %37 = vector.broadcast %36 : vector<1x128xf32> to vector<12x128xf32>
    %38 = arith.addf %35, %37 : vector<12x128xf32>
    %c0_20 = arith.constant 0 : index
    %c0_21 = arith.constant 0 : index
    %39 = vector.load %arg8[%c0_20, %c0_21] : memref<12x128xf32, #tpu.memory_space<vmem>>, vector<12x128xf32>
    tpu.vector_store %arg8[%c0_20, %c0_21], %38 {strides = array<i32>} : memref<12x128xf32, #tpu.memory_space<vmem>>, vector<12x128xf32>,
    return
  }
  func.func @transform_0(%arg0: i32) -> (i32, i32) {
    %c0_i32 = arith.constant 0 : i32
    %c0_i32_0 = arith.constant 0 : i32
    return %arg0, %c0_i32 : i32, i32
  }
  func.func @transform_1(%arg0: i32) -> (i32, i32) {
    %c0_i32 = arith.constant 0 : i32
    %c0_i32_0 = arith.constant 0 : i32
    %c0_i32_1 = arith.constant 0 : i32
    return %c0_i32, %c0_i32_0 : i32, i32
  }
  func.func @transform_2(%arg0: i32) -> (i32, i32) {
    %c0_i32 = arith.constant 0 : i32
    %c0_i32_0 = arith.constant 0 : i32
    %c0_i32_1 = arith.constant 0 : i32
    return %c0_i32, %c0_i32_0 : i32, i32
  }
  func.func @transform_3(%arg0: i32) -> (i32, i32) {
    %c0_i32 = arith.constant 0 : i32
    %c0_i32_0 = arith.constant 0 : i32
    %c0_i32_1 = arith.constant 0 : i32
    return %c0_i32, %c0_i32_0 : i32, i32
  }
  func.func @transform_4(%arg0: i32) -> (i32, i32) {
    %c0_i32 = arith.constant 0 : i32
    %c0_i32_0 = arith.constant 0 : i32
    %c0_i32_1 = arith.constant 0 : i32
    return %c0_i32, %c0_i32_0 : i32, i32
  }
  func.func @transform_5(%arg0: i32) -> (i32, i32) {
    %c0_i32 = arith.constant 0 : i32
    %c0_i32_0 = arith.constant 0 : i32
    %c0_i32_1 = arith.constant 0 : i32
    return %c0_i32, %c0_i32_0 : i32, i32
  }
  func.func @transform_6(%arg0: i32) -> (i32, i32) {
    %c0_i32 = arith.constant 0 : i32
    %c0_i32_0 = arith.constant 0 : i32
    %c0_i32_1 = arith.constant 0 : i32
    return %c0_i32, %c0_i32_0 : i32, i32
  }
  func.func @transform_7(%arg0: i32) -> (i32, i32) {
    %c0_i32 = arith.constant 0 : i32
    %c0_i32_0 = arith.constant 0 : i32
    return %arg0, %c0_i32 : i32, i32
  }
}

</mosaic_0001>

<llo_original>
// kernel: tpu_custom_call.1
$region0: #{tpu_custom_call.1}
  #allocation0 [shape = 'u32[]', space=smem, size = 0x4, offset = 0x4, fixed_abs, tag = 'smem constant byte address 0x4 - core index']
  #allocation1 [shape = 'u32[144,128]{1,0:T(1,128)}', space=vmem, size = 0x12000, scoped, tag = 'internal scratch']
  %s0 = inlined_call_operand.hbm [shape: f32[12,128], index: 0, kind: input, shape index: {}]
  %s1 = inlined_call_operand.hbm [shape: bf16[128,128], index: 1, kind: input, shape index: {}]
  %s2 = inlined_call_operand.vmem [shape: f32[1,128], index: 2, kind: input, shape index: {}]
  %s3 = inlined_call_operand.hbm [shape: bf16[128,128], index: 3, kind: input, shape index: {}]
  %s4 = inlined_call_operand.vmem [shape: f32[1,128], index: 4, kind: input, shape index: {}]
  %s5 = inlined_call_operand.vmem [shape: f32[1,128], index: 5, kind: input, shape index: {}]
  %s6 = inlined_call_operand.vmem [shape: f32[1,128], index: 6, kind: input, shape index: {}]
  %s7 = inlined_call_operand.hbm [shape: f32[12,128], index: 7, kind: output, shape index: {}]
  %s8 = sld [smem:[#allocation0]]
  $region50: #{tpu_custom_call.1} parent=0
    _
  %s10 = ssub.s32 1, %s8
  %s11 = scalar_select 0, %s10, %s8
  $region1: #{tpu_custom_call.1} parent=0
    #allocation2 [shape = 'u8[8192]{0}', space=vmem, size = 0x2000, scoped, tag = 'input window, operand 0, single buffered']
    #allocation3 [shape = 's32[1]{0}', space=sflag, size = 0x4, scoped, tag = 'scoped memory for tpu_custom_call.1']
    #allocation4 [shape = 's32[1]{0}', space=sflag, size = 0x4, scoped, tag = 'scoped memory for tpu_custom_call.1']
    #allocation5 [shape = 'u8[32768]{0}', space=vmem, size = 0x8000, scoped, tag = 'input window, operand 1, single buffered']
    #allocation6 [shape = 's32[1]{0}', space=sflag, size = 0x4, scoped, tag = 'scoped memory for tpu_custom_call.1']
    #allocation7 [shape = 'u8[32768]{0}', space=vmem, size = 0x8000, scoped, tag = 'input window, operand 3, single buffered']
    #allocation8 [shape = 'u8[8192]{0}', space=vmem, size = 0x2000, scoped, tag = 'output window, operand 0, single buffered']
    %12 = vsyncpa [#allocation3], 0
    %13 = vsyncpa [#allocation6], 0
    %14 = vsyncpa [#allocation4], 0
    // Predicated region
    $region2: #{tpu_custom_call.1} parent=1 // pred_check
      _
    $region3: #{tpu_custom_call.1} parent=1 // pred_check_branch
      %16 = sbr.rel (0) target = $region5
    $region4: #{tpu_custom_call.1} parent=1 // pred_region
      %s18 = ssub.s32 256, 256
      %19 = vsyncadd [#allocation3], %s18
      %s20 = sshll.u32 [#allocation2], 4
      %s21 = int_to_ptr.vmem [resolvable:$true] %s20
      %26 = dma.hbm_to_vmem [thread:$0]  %s0, 256, %s21, [#allocation3], 128, 128, 8
    $region5: #{tpu_custom_call.1} parent=1 // pred_fallthru
      _
    // Predicated region
    $region6: #{tpu_custom_call.1} parent=1 // pred_check
      _
    $region7: #{tpu_custom_call.1} parent=1 // pred_check_branch
      %28 = sbr.rel (0) target = $region9
    $region8: #{tpu_custom_call.1} parent=1 // pred_region
      %s30 = ssub.s32 1024, 1024
      %31 = vsyncadd [#allocation6], %s30
      %s32 = sshll.u32 [#allocation5], 4
      %s33 = int_to_ptr.vmem [resolvable:$true] %s32
      %38 = dma.hbm_to_vmem [thread:$0]  %s1, 1024, %s33, [#allocation6], 64, 64, 4
    $region9: #{tpu_custom_call.1} parent=1 // pred_fallthru
      _
    // Predicated region
    $region10: #{tpu_custom_call.1} parent=1 // pred_check
      _
    $region11: #{tpu_custom_call.1} parent=1 // pred_check_branch
      %40 = sbr.rel (0) target = $region13
    $region12: #{tpu_custom_call.1} parent=1 // pred_region
      _
    $region13: #{tpu_custom_call.1} parent=1 // pred_fallthru
      _
    // Predicated region
    $region14: #{tpu_custom_call.1} parent=1 // pred_check
      _
    $region15: #{tpu_custom_call.1} parent=1 // pred_check_branch
      %42 = sbr.rel (0) target = $region17
    $region16: #{tpu_custom_call.1} parent=1 // pred_region
      %s44 = ssub.s32 1024, 1024
      %45 = vsyncadd [#allocation6], %s44
      %s46 = sshll.u32 [#allocation7], 4
      %s47 = int_to_ptr.vmem [resolvable:$true] %s46
      %52 = dma.hbm_to_vmem [thread:$0]  %s3, 1024, %s47, [#allocation6], 64, 64, 4
    $region17: #{tpu_custom_call.1} parent=1 // pred_fallthru
      _
    // Predicated region
    $region18: #{tpu_custom_call.1} parent=1 // pred_check
      _
    $region19: #{tpu_custom_call.1} parent=1 // pred_check_branch
      %54 = sbr.rel (0) target = $region21
    $region20: #{tpu_custom_call.1} parent=1 // pred_region
      _
    $region21: #{tpu_custom_call.1} parent=1 // pred_fallthru
      _
    // Predicated region
    $region22: #{tpu_custom_call.1} parent=1 // pred_check
      _
    $region23: #{tpu_custom_call.1} parent=1 // pred_check_branch
      %56 = sbr.rel (0) target = $region25
    $region24: #{tpu_custom_call.1} parent=1 // pred_region
      _
    $region25: #{tpu_custom_call.1} parent=1 // pred_fallthru
      _
    // Predicated region
    $region26: #{tpu_custom_call.1} parent=1 // pred_check
      _
    $region27: #{tpu_custom_call.1} parent=1 // pred_check_branch
      %58 = sbr.rel (0) target = $region29
    $region28: #{tpu_custom_call.1} parent=1 // pred_region
      _
    $region29: #{tpu_custom_call.1} parent=1 // pred_fallthru
      _
    // Predicated region
    $region30: #{tpu_custom_call.1} parent=1 // pred_check
      _
    $region31: #{tpu_custom_call.1} parent=1 // pred_check_branch
      %60 = sbr.rel (0) target = $region33
    $region32: #{tpu_custom_call.1} parent=1 // pred_region
      %61 = dma.done [#allocation3], 256
    $region33: #{tpu_custom_call.1} parent=1 // pred_fallthru
      _
    // Predicated region
    $region34: #{tpu_custom_call.1} parent=1 // pred_check
      _
    $region35: #{tpu_custom_call.1} parent=1 // pred_check_branch
      %63 = sbr.rel (0) target = $region37
    $region36: #{tpu_custom_call.1} parent=1 // pred_region
      %64 = dma.done [#allocation6], 1024
    $region37: #{tpu_custom_call.1} parent=1 // pred_fallthru
      _
    // Predicated region
    $region38: #{tpu_custom_call.1} parent=1 // pred_check
      _
    $region39: #{tpu_custom_call.1} parent=1 // pred_check_branch
      %66 = sbr.rel (0) target = $region41
    $region40: #{tpu_custom_call.1} parent=1 // pred_region
      %67 = dma.done [#allocation6], 1024
    $region41: #{tpu_custom_call.1} parent=1 // pred_fallthru
      _
    %v69 = vld [vmem:[#allocation2] sm:$0xff]
    %v70 = vld [vmem:[#allocation2 + $0x8] sm:$0xf]
    %v71 = vld [vmem:[#allocation5] sm:$0xf]
    %v72 = vld [vmem:[#allocation5 + $0x4] sm:$0xf]
    %v73 = vld [vmem:[#allocation5 + $0x8] sm:$0xf]
    %v74 = vld [vmem:[#allocation5 + $0xc] sm:$0xf]
    %v75 = vld [vmem:[#allocation5 + $0x10] sm:$0xf]
    %v76 = vld [vmem:[#allocation5 + $0x14] sm:$0xf]
    %v77 = vld [vmem:[#allocation5 + $0x18] sm:$0xf]
    %v78 = vld [vmem:[#allocation5 + $0x1c] sm:$0xf]
    %v79 = vld [vmem:[#allocation5 + $0x20] sm:$0xf]
    %v80 = vld [vmem:[#allocation5 + $0x24] sm:$0xf]
    %v81 = vld [vmem:[#allocation5 + $0x28] sm:$0xf]
    %v82 = vld [vmem:[#allocation5 + $0x2c] sm:$0xf]
    %v83 = vld [vmem:[#allocation5 + $0x30] sm:$0xf]
    %v84 = vld [vmem:[#allocation5 + $0x34] sm:$0xf]
    %v85 = vld [vmem:[#allocation5 + $0x38] sm:$0xf]
    %v86 = vld [vmem:[#allocation5 + $0x3c] sm:$0xf]
    %v87 = vpack.c.bf16 %v70, %v69
    %v88 = vld [vmem:[%s2] sm:$0x1]
    %v90 = vlaneseq
    %v91 = vshrl.u32 %v90, 7
    %v92 = vsub.s32 0, %v91
    %v93 = vrot.slane %v88, %v92
    %v111 = vunpack.c.l.b16 %v71
    %v112 = vunpack.c.l.b16 %v72
    %v113 = vunpack.c.l.b16 %v73
    %v114 = vunpack.c.l.b16 %v74
    %v115 = vunpack.c.l.b16 %v75
    %v116 = vunpack.c.l.b16 %v76
    %v117 = vunpack.c.l.b16 %v77
    %v118 = vunpack.c.l.b16 %v78
    %v119 = vunpack.c.l.b16 %v79
    %v120 = vunpack.c.l.b16 %v80
    %v121 = vunpack.c.l.b16 %v81
    %v122 = vunpack.c.l.b16 %v82
    %v123 = vunpack.c.l.b16 %v83
    %v124 = vunpack.c.l.b16 %v84
    %v125 = vunpack.c.l.b16 %v85
    %v126 = vunpack.c.l.b16 %v86
    %v127 = vpack.c.b16 %v112, %v111
    %v128 = vpack.c.b16 %v114, %v113
    %v129 = vpack.c.b16 %v116, %v115
    %v130 = vpack.c.b16 %v118, %v117
    %v131 = vpack.c.b16 %v120, %v119
    %v132 = vpack.c.b16 %v122, %v121
    %v133 = vpack.c.b16 %v124, %v123
    %v134 = vpack.c.b16 %v126, %v125
    %143 = vmatprep.subr.bf16.mxu0 0
    %144 = vmatpush1.bf16.msra.mxu0 %v134
    %145 = vmatprep.subr.bf16.mxu0 0
    %146 = vmatpush1.bf16.msra.mxu0 %v133
    %147 = vmatprep.subr.bf16.mxu0 0
    %148 = vmatpush1.bf16.msra.mxu0 %v132
    %149 = vmatprep.subr.bf16.mxu0 0
    %150 = vmatpush1.bf16.msra.mxu0 %v131
    %151 = vmatprep.subr.bf16.mxu0 0
    %152 = vmatpush1.bf16.msra.mxu0 %v130
    %153 = vmatprep.subr.bf16.mxu0 0
    %154 = vmatpush1.bf16.msra.mxu0 %v129
    %155 = vmatprep.subr.bf16.mxu0 0
    %156 = vmatpush1.bf16.msra.mxu0 %v128
    %157 = vmatprep.subr.bf16.mxu0 0
    %158 = vmatpush1.bf16.msra.mxu0 %v127
    %159 = vmatprep.subr.bf16.mxu0 0
    %160 = vmatpush2.bf16.msra.mxu0 0
    %161 = vmatprep.subr.bf16.mxu0 0
    %162 = vmatpush2.bf16.msra.mxu0 0
    %163 = vmatprep.subr.bf16.mxu0 0
    %164 = vmatpush2.bf16.msra.mxu0 0
    %165 = vmatprep.subr.bf16.mxu0 0
    %166 = vmatpush2.bf16.msra.mxu0 0
    %167 = vmatprep.subr.bf16.mxu0 0
    %168 = vmatpush2.bf16.msra.mxu0 0
    %169 = vmatprep.subr.bf16.mxu0 0
    %170 = vmatpush2.bf16.msra.mxu0 0
    %171 = vmatprep.subr.bf16.mxu0 0
    %172 = vmatpush2.bf16.msra.mxu0 0
    %173 = vmatprep.subr.bf16.mxu0 0
    %174 = vmatpush2.bf16.msra.mxu0 0
    %175 = vmatprep.mubr.bf16.mxu0 0
    %176 = vmatmul.mubr.bf16.gmra.mxu0 %v87
    %v177 = vpop.f32.mrf.mxu0
    %v178 = vadd.f32 %v93, %v177
    %v179 = vpop.f32.mrf.mxu0
    %v180 = vpop.f32.mrf.mxu0
    %v181 = vadd.f32 %v93, %v180
    %v182 = vpop.f32.mrf.mxu0
    %183 = vdwg.mxu0
    %v184 = vmax.f32 %v178, 0.0
    %v185 = vmax.f32 %v181, 0.0
    %v186 = vld [vmem:[#allocation7] sm:$0xf]
    %v187 = vld [vmem:[#allocation7 + $0x4] sm:$0xf]
    %v188 = vld [vmem:[#allocation7 + $0x8] sm:$0xf]
    %v189 = vld [vmem:[#allocation7 + $0xc] sm:$0xf]
    %v190 = vld [vmem:[#allocation7 + $0x10] sm:$0xf]
    %v191 = vld [vmem:[#allocation7 + $0x14] sm:$0xf]
    %v192 = vld [vmem:[#allocation7 + $0x18] sm:$0xf]
    %v193 = vld [vmem:[#allocation7 + $0x1c] sm:$0xf]
    %v194 = vld [vmem:[#allocation7 + $0x20] sm:$0xf]
    %v195 = vld [vmem:[#allocation7 + $0x24] sm:$0xf]
    %v196 = vld [vmem:[#allocation7 + $0x28] sm:$0xf]
    %v197 = vld [vmem:[#allocation7 + $0x2c] sm:$0xf]
    %v198 = vld [vmem:[#allocation7 + $0x30] sm:$0xf]
    %v199 = vld [vmem:[#allocation7 + $0x34] sm:$0xf]
    %v200 = vld [vmem:[#allocation7 + $0x38] sm:$0xf]
    %v201 = vld [vmem:[#allocation7 + $0x3c] sm:$0xf]
    %v202 = vpack.c.bf16 %v185, %v184
    %v203 = vld [vmem:[%s4] sm:$0x1]
    %v205 = vlaneseq
    %v206 = vshrl.u32 %v205, 7
    %v207 = vsub.s32 0, %v206
    %v208 = vrot.slane %v203, %v207
    %v226 = vunpack.c.l.b16 %v186
    %v227 = vunpack.c.l.b16 %v187
    %v228 = vunpack.c.l.b16 %v188
    %v229 = vunpack.c.l.b16 %v189
    %v230 = vunpack.c.l.b16 %v190
    %v231 = vunpack.c.l.b16 %v191
    %v232 = vunpack.c.l.b16 %v192
    %v233 = vunpack.c.l.b16 %v193
    %v234 = vunpack.c.l.b16 %v194
    %v235 = vunpack.c.l.b16 %v195
    %v236 = vunpack.c.l.b16 %v196
    %v237 = vunpack.c.l.b16 %v197
    %v238 = vunpack.c.l.b16 %v198
    %v239 = vunpack.c.l.b16 %v199
    %v240 = vunpack.c.l.b16 %v200
    %v241 = vunpack.c.l.b16 %v201
    %v242 = vpack.c.b16 %v227, %v226
    %v243 = vpack.c.b16 %v229, %v228
    %v244 = vpack.c.b16 %v231, %v230
    %v245 = vpack.c.b16 %v233, %v232
    %v246 = vpack.c.b16 %v235, %v234
    %v247 = vpack.c.b16 %v237, %v236
    %v248 = vpack.c.b16 %v239, %v238
    %v249 = vpack.c.b16 %v241, %v240
    %258 = vmatprep.subr.bf16.mxu0 0
    %259 = vmatpush1.bf16.msra.mxu0 %v249
    %260 = vmatprep.subr.bf16.mxu0 0
    %261 = vmatpush1.bf16.msra.mxu0 %v248
    %262 = vmatprep.subr.bf16.mxu0 0
    %263 = vmatpush1.bf16.msra.mxu0 %v247
    %264 = vmatprep.subr.bf16.mxu0 0
    %265 = vmatpush1.bf16.msra.mxu0 %v246
    %266 = vmatprep.subr.bf16.mxu0 0
    %267 = vmatpush1.bf16.msra.mxu0 %v245
    %268 = vmatprep.subr.bf16.mxu0 0
    %269 = vmatpush1.bf16.msra.mxu0 %v244
    %270 = vmatprep.subr.bf16.mxu0 0
    %271 = vmatpush1.bf16.msra.mxu0 %v243
    %272 = vmatprep.subr.bf16.mxu0 0
    %273 = vmatpush1.bf16.msra.mxu0 %v242
    %274 = vmatprep.subr.bf16.mxu0 0
    %275 = vmatpush2.bf16.msra.mxu0 0
    %276 = vmatprep.subr.bf16.mxu0 0
    %277 = vmatpush2.bf16.msra.mxu0 0
    %278 = vmatprep.subr.bf16.mxu0 0
    %279 = vmatpush2.bf16.msra.mxu0 0
    %280 = vmatprep.subr.bf16.mxu0 0
    %281 = vmatpush2.bf16.msra.mxu0 0
    %282 = vmatprep.subr.bf16.mxu0 0
    %283 = vmatpush2.bf16.msra.mxu0 0
    %284 = vmatprep.subr.bf16.mxu0 0
    %285 = vmatpush2.bf16.msra.mxu0 0
    %286 = vmatprep.subr.bf16.mxu0 0
    %287 = vmatpush2.bf16.msra.mxu0 0
    %288 = vmatprep.subr.bf16.mxu0 0
    %289 = vmatpush2.bf16.msra.mxu0 0
    %290 = vmatprep.mubr.bf16.mxu0 0
    %291 = vmatmul.mubr.bf16.gmra.mxu0 %v202
    %v292 = vpop.f32.mrf.mxu0
    %v293 = vadd.f32 %v208, %v292
    %v294 = vpop.f32.mrf.mxu0
    %v295 = vpop.f32.mrf.mxu0
    %v296 = vadd.f32 %v208, %v295
    %v297 = vpop.f32.mrf.mxu0
    %298 = vdwg.mxu0
    %299 = vadd.xlane.f32.xlu0 %v293
    %v300 = vpop.xlane.xlu0 %299
    %vm301 = vcmask 1043456
    %v302 = vsel %vm301, %v296, 0.0
    %303 = vadd.xlane.f32.xlu0 %v302
    %v304 = vpop.xlane.xlu0 %303
    %v305 = vrcp.pop 128.0
    %v306 = vmul.f32 %v300, %v305
    %v307 = vmul.f32 %v304, %v305
    %v308 = vsub.f32 %v293, %v306
    %v309 = vsub.f32 %v296, %v307
    %v310 = vmul.f32 %v308, %v308
    %v311 = vmul.f32 %v309, %v309
    %312 = vadd.xlane.f32.xlu0 %v310
    %v313 = vpop.xlane.xlu0 %312
    %v314 = vsel %vm301, %v311, 0.0
    %315 = vadd.xlane.f32.xlu0 %v314
    %v316 = vpop.xlane.xlu0 %315
    %v317 = vmul.f32 %v313, %v305
    %v318 = vmul.f32 %v316, %v305
    %v319 = vadd.f32 %v317, 1e-05
    %v320 = vadd.f32 %v318, 1e-05
    %v321 = vrsqrt.pop %v319
    %v322 = vrsqrt.pop %v320
    %v323 = vmul.f32 %v308, %v321
    %v324 = vmul.f32 %v309, %v322
    %v325 = vld [vmem:[%s5] sm:$0x1]
    %v327 = vlaneseq
    %v328 = vshrl.u32 %v327, 7
    %v329 = vsub.s32 0, %v328
    %v330 = vrot.slane %v325, %v329
    %v332 = vmul.f32 %v323, %v330
    %v333 = vmul.f32 %v324, %v330
    %v334 = vld [vmem:[%s6] sm:$0x1]
    %v336 = vlaneseq
    %v337 = vshrl.u32 %v336, 7
    %v338 = vsub.s32 0, %v337
    %v339 = vrot.slane %v334, %v338
    %v341 = vadd.f32 %v332, %v339
    %v342 = vadd.f32 %v333, %v339
    %343 = vst [vmem:[#allocation8] sm:$0xff] %v341
    %344 = vst [vmem:[#allocation8 + $0x8] sm:$0xf] %v342
    // Predicated region
    $region42: #{tpu_custom_call.1} parent=1 // pred_check
      _
    $region43: #{tpu_custom_call.1} parent=1 // pred_check_branch
      %346 = sbr.rel (0) target = $region45
    $region44: #{tpu_custom_call.1} parent=1 // pred_region
      %s348 = ssub.s32 256, 256
      %349 = vsyncadd [#allocation4], %s348
      %s350 = sshll.u32 [#allocation8], 4
      %s351 = int_to_ptr.vmem [resolvable:$true] %s350
      %356 = dma.vmem_to_hbm [thread:$0]  %s351, 256, %s7, [#allocation4], 128, 128, 8
    $region45: #{tpu_custom_call.1} parent=1 // pred_fallthru
      _
    // Predicated region
    $region46: #{tpu_custom_call.1} parent=1 // pred_check
      _
    $region47: #{tpu_custom_call.1} parent=1 // pred_check_branch
      %358 = sbr.rel (0) target = $region49
    $region48: #{tpu_custom_call.1} parent=1 // pred_region
      %359 = dma.done [#allocation4], 256
    $region49: #{tpu_custom_call.1} parent=1 // pred_fallthru
      _
    %360 = vsyncpa [#allocation3], 1
    %361 = vsyncpa [#allocation6], 1
    %362 = vsyncpa [#allocation4], 1

</llo_original>
